<compile_context>
chip_gen: v6e
topology: v6e:2x2x1
jax: 0.10.0
libtpu: 0.0.40
codegen_flags: <defaults>
</compile_context>

<pallas_src>
import math
import jax
import jax.numpy as jnp
from jax.experimental import pallas as pl
from jax.experimental.pallas import tpu as pltpu


# ----------------------------------------------------------------------------
# Kernel
# ----------------------------------------------------------------------------
def make_actor_kernel(action_high: float):
    """Returns a kernel closure with action_high baked in as a constant."""

    def actor_kernel(x_ref, w1_ref, b1_ref, w2_ref, b2_ref, w3_ref, b3_ref, o_ref):
        # Layer 1: unpadded contraction K = state_size. Cast to bf16 only at
        # the MXU boundary, accumulate f32; bias/relu in f32 (v5e has no
        # bf16 VPU/EUP).
        h1 = jnp.dot(x_ref[...].astype(jnp.bfloat16), w1_ref[...],
                     preferred_element_type=jnp.float32)
        h1 = jnp.maximum(h1 + b1_ref[...], 0.0)

        # Layer 2: bf16 matmul, f32 accumulate + elementwise.
        h2 = jnp.dot(h1.astype(jnp.bfloat16), w2_ref[...],
                     preferred_element_type=jnp.float32)
        h2 = jnp.maximum(h2 + b2_ref[...], 0.0)

        # Layer 3: bf16 matmul, f32 bias/tanh/scale, lane-dense bf16 store.
        h3 = jnp.dot(h2.astype(jnp.bfloat16), w3_ref[...],
                     preferred_element_type=jnp.float32)
        o_ref[...] = (action_high * jnp.tanh(h3 + b3_ref[...])).astype(o_ref.dtype)

    return actor_kernel


# ----------------------------------------------------------------------------
# Wrapper
# ----------------------------------------------------------------------------
def _round_up(n: int, m: int) -> int:
    return -(-n // m) * m


def _choose_batch_tiling(batch: int, block_batch: int):
    """Pick (tile_rows, padded_batch, n_tiles).

    * each tile <= block_batch,
    * tile rows are a multiple of 16 (bf16 sublane packing),
    * padding waste is minimized (tile adapts to the batch instead of padding
      the batch up to a fixed tile),
    * for batch >= 128 the grid has >= 2 steps so v7x megacore splits work.
    """
    n_tiles = pl.cdiv(batch, block_batch)
    if n_tiles == 1 and batch >= 128:
        n_tiles = 2
    tb = _round_up(pl.cdiv(batch, n_tiles), 16)
    return tb, tb * n_tiles, n_tiles


def actor_forward(x, packed_params, action_high: float, action_size: int,
                  *, block_batch: int = 512):
    """Runs the Actor forward pass in one batch-tiled pallas_call.

    `packed_params` are the padded/bf16 parameters from `pack_actor_params`.
    Weights remain VMEM-resident across all batch tiles (index_map -> (0,0)).
    """
    w1, b1, w2, b2, w3, b3 = packed_params
    batch, state_size = x.shape
    assert w1.shape[0] == state_size
    h1 = w1.shape[1]
    h2 = w2.shape[1]
    a_pad = w3.shape[1]

    tb, padded_batch, n_tiles = _choose_batch_tiling(batch, block_batch)

    # Only the batch dim is (possibly) padded; x stays unpadded f32 otherwise.
    xp = x if padded_batch == batch else jnp.pad(
        x, ((0, padded_batch - batch), (0, 0)))

    flops = 2 * padded_batch * (state_size * h1 + h1 * h2 + h2 * a_pad)
    bytes_accessed = int(
        padded_batch * state_size * 4                                  # x read (f32)
        + sum(int(p.size) * p.dtype.itemsize for p in packed_params)   # params
        + padded_batch * a_pad * 2)                                    # bf16 writeback

    out_padded = pl.pallas_call(
        make_actor_kernel(float(action_high)),
        out_shape=jax.ShapeDtypeStruct((padded_batch, a_pad), jnp.bfloat16),
        grid=(n_tiles,),
        in_specs=[
            pl.BlockSpec((tb, state_size), lambda i: (i, 0)),  # x: tiled over batch
            pl.BlockSpec(w1.shape, lambda i: (0, 0)),          # weights/biases: resident
            pl.BlockSpec(b1.shape, lambda i: (0, 0)),
            pl.BlockSpec(w2.shape, lambda i: (0, 0)),
            pl.BlockSpec(b2.shape, lambda i: (0, 0)),
            pl.BlockSpec(w3.shape, lambda i: (0, 0)),
            pl.BlockSpec(b3.shape, lambda i: (0, 0)),
        ],
        out_specs=pl.BlockSpec((tb, a_pad), lambda i: (i, 0)),
        compiler_params=pltpu.CompilerParams(
            dimension_semantics=("parallel",),            # megacore on v7x
            vmem_limit_bytes=32 * 1024 * 1024),           # headroom on v5e
        cost_estimate=pl.CostEstimate(
            flops=flops,
            transcendentals=padded_batch * a_pad,
            bytes_accessed=bytes_accessed),
    )(xp, w1, b1, w2, b2, w3, b3)

    # Drop batch/lane padding; cast the tiny sliced result back to f32.
    return out_padded[:batch, :action_size].astype(jnp.float32)


# ----------------------------------------------------------------------------
# Parameter init (matches PyTorch Actor) + packing for the kernel
# ----------------------------------------------------------------------------
def xavier_uniform(key, fan_in, fan_out, dtype=jnp.float32):
    """Matches torch.nn.init.xavier_uniform_ (gain=1); stored (in, out)."""
    bound = math.sqrt(6.0 / (fan_in + fan_out))
    return jax.random.uniform(key, (fan_in, fan_out), dtype=dtype,
                              minval=-bound, maxval=bound)


def init_actor_params(key, state_size, action_size):
    """Unpadded f32 params mirroring Actor.__init__.

    Weights: xavier_uniform (module default). Biases: nn.Linear default
    U(-1/sqrt(fan_in), 1/sqrt(fan_in)) (init_weights does not touch biases).
    """
    k = jax.random.split(key, 6)
    w1 = xavier_uniform(k[0], state_size, 400)
    w2 = xavier_uniform(k[1], 400, 300)
    w3 = xavier_uniform(k[2], 300, action_size)

    def bias(kk, fan_in, n):
        bd = 1.0 / math.sqrt(fan_in)
        return jax.random.uniform(kk, (1, n), dtype=jnp.float32,
                                  minval=-bd, maxval=bd)

    b1 = bias(k[3], state_size, 400)
    b2 = bias(k[4], 400, 300)
    b3 = bias(k[5], 300, action_size)
    return (w1, b1, w2, b2, w3, b3)


def _pad2d(a, rows, cols):
    return jnp.pad(a, ((0, rows - a.shape[0]), (0, cols - a.shape[1])))


def pack_actor_params(params):
    """Zero-pad hidden/action dims to multiples of 128, cast weights to bf16.

    The state (contraction) dim of w1 stays unpadded: the kernel contracts
    with the real K=state_size. Zero padding elsewhere is exact for this
    network (padded hidden units stay 0 through relu; padded output columns
    are tanh(0)=0 and sliced off). Biases stay f32 so elementwise math runs
    in f32 (v5e-friendly).
    """
    w1, b1, w2, b2, w3, b3 = params
    state_size = w1.shape[0]
    h1_pad = _round_up(w1.shape[1], 128)   # 400 -> 512
    h2_pad = _round_up(w2.shape[1], 128)   # 300 -> 384
    a_pad = _round_up(w3.shape[1], 128)    # 4   -> 128 (lane-dense output)

    w1p = _pad2d(w1, state_size, h1_pad).astype(jnp.bfloat16)
    w2p = _pad2d(w2, h1_pad, h2_pad).astype(jnp.bfloat16)
    w3p = _pad2d(w3, h2_pad, a_pad).astype(jnp.bfloat16)
    b1p = _pad2d(b1, 1, h1_pad)
    b2p = _pad2d(b2, 1, h2_pad)
    b3p = _pad2d(b3, 1, a_pad)
    return (w1p, b1p, w2p, b2p, w3p, b3p)


# ----------------------------------------------------------------------------
# Pure-JAX references
# ----------------------------------------------------------------------------
def actor_reference_packed(x, packed_params, action_high, action_size):
    """Same bf16/f32 mixed-precision math as the kernel (tight check)."""
    w1, b1, w2, b2, w3, b3 = packed_params
    h = jnp.maximum(jnp.dot(x.astype(jnp.bfloat16), w1,
                            preferred_element_type=jnp.float32) + b1, 0.0)
    h = jnp.maximum(jnp.dot(h.astype(jnp.bfloat16), w2,
                            preferred_element_type=jnp.float32) + b2, 0.0)
    out = action_high * jnp.tanh(
        jnp.dot(h.astype(jnp.bfloat16), w3,
                preferred_element_type=jnp.float32) + b3)
    # Mirror the kernel's bf16 store + f32 upcast.
    return out.astype(jnp.bfloat16).astype(jnp.float32)[:, :action_size]


def actor_reference_f32(x, params, action_high):
    """Full-precision reference of the original module (loose check)."""
    w1, b1, w2, b2, w3, b3 = params
    h = jnp.maximum(x @ w1 + b1, 0.0)
    h = jnp.maximum(h @ w2 + b2, 0.0)
    return action_high * jnp.tanh(h @ w3 + b3)


# ----------------------------------------------------------------------------
# Smoke test
# ----------------------------------------------------------------------------
if __name__ == "__main__":
    # Forward-consistent shapes: state dim 24 -> 4 actions, action_high=2.
    state_size = 24
    action_size = 4
    action_high = 2.0

    key = jax.random.PRNGKey(0)
    kx_small, kp, kx_big = jax.random.split(key, 3)

    params_f32 = init_actor_params(kp, state_size, action_size)
    params_packed = pack_actor_params(params_f32)

    # --- Small "acting" batch: single tile, grid=(1,) -----------------------
    x_small = jax.random.normal(kx_small, (8, state_size), dtype=jnp.float32)
    out_small = jax.block_until_ready(
        actor_forward(x_small, params_packed, action_high, action_size))
    assert out_small.shape == (8, action_size)

    ref_small_bf16 = actor_reference_packed(x_small, params_packed,
                                            action_high, action_size)
    assert jnp.allclose(out_small, ref_small_bf16, atol=2e-2, rtol=2e-2), \
        "small batch: mismatch vs bf16 reference"
    ref_small_f32 = actor_reference_f32(x_small, params_f32, action_high)
    assert jnp.allclose(out_small, ref_small_f32, atol=1e-1, rtol=1e-1), \
        "small batch: mismatch vs f32 reference"

    # --- Larger batch: exercises adaptive tiling, batch padding, grid=(2,) --
    x_big = jax.random.normal(kx_big, (300, state_size), dtype=jnp.float32)
    out_big = jax.block_until_ready(
        actor_forward(x_big, params_packed, action_high, action_size))
    assert out_big.shape == (300, action_size)

    ref_big_bf16 = actor_reference_packed(x_big, params_packed,
                                          action_high, action_size)
    assert jnp.allclose(out_big, ref_big_bf16, atol=2e-2, rtol=2e-2), \
        "big batch: mismatch vs bf16 reference"
    ref_big_f32 = actor_reference_f32(x_big, params_f32, action_high)
    assert jnp.allclose(out_big, ref_big_f32, atol=1e-1, rtol=1e-1), \
        "big batch: mismatch vs f32 reference"

    print("KERNEL_OK")
</pallas_src>

<mosaic_0001>
module attributes {stable_mosaic.version = 11 : i64} {
  func.func @actor_kernel(%arg0: i32, %arg1: memref<16x24xf32, #tpu.memory_space<vmem>>, %arg2: memref<24x512xbf16, #tpu.memory_space<vmem>>, %arg3: memref<1x512xf32, #tpu.memory_space<vmem>>, %arg4: memref<512x384xbf16, #tpu.memory_space<vmem>>, %arg5: memref<1x384xf32, #tpu.memory_space<vmem>>, %arg6: memref<384x128xbf16, #tpu.memory_space<vmem>>, %arg7: memref<1x128xf32, #tpu.memory_space<vmem>>, %arg8: memref<16x128xbf16, #tpu.memory_space<vmem>>) attributes {dimension_semantics = [#tpu.dimension_semantics<parallel>], iteration_bounds = array<i64: 1>, scalar_prefetch = 0 : i64, scratch_operands = 0 : i64, tpu.core_type = #tpu.core_type<tc>, window_params = [{transform_indices = @transform_0, window_bounds = array<i64: 16, 24>}, {pipeline_mode = #tpu.pipeline_mode<synchronous>, transform_indices = @transform_1, window_bounds = array<i64: 24, 512>}, {pipeline_mode = #tpu.pipeline_mode<synchronous>, transform_indices = @transform_2, window_bounds = array<i64: 1, 512>}, {pipeline_mode = #tpu.pipeline_mode<synchronous>, transform_indices = @transform_3, window_bounds = array<i64: 512, 384>}, {pipeline_mode = #tpu.pipeline_mode<synchronous>, transform_indices = @transform_4, window_bounds = array<i64: 1, 384>}, {pipeline_mode = #tpu.pipeline_mode<synchronous>, transform_indices = @transform_5, window_bounds = array<i64: 384, 128>}, {pipeline_mode = #tpu.pipeline_mode<synchronous>, transform_indices = @transform_6, window_bounds = array<i64: 1, 128>}, {transform_indices = @transform_7, window_bounds = array<i64: 16, 128>}]} {
    %c0 = arith.constant 0 : index
    %c0_0 = arith.constant 0 : index
    %0 = vector.load %arg1[%c0, %c0_0] : memref<16x24xf32, #tpu.memory_space<vmem>>, vector<16x24xf32>
    %1 = arith.truncf %0 : vector<16x24xf32> to vector<16x24xbf16>
    %c0_1 = arith.constant 0 : index
    %c0_2 = arith.constant 0 : index
    %2 = vector.load %arg2[%c0_1, %c0_2] : memref<24x512xbf16, #tpu.memory_space<vmem>>, vector<24x512xbf16>
    %cst = arith.constant dense<0.000000e+00> : vector<16x512xf32>
    %3 = tpu.matmul %1, %2, %cst {dimension_numbers = #tpu.dot_dimension_numbers<[1], [0], [0], [1], [0, 0, 1, 1], [], []>} : vector<16x24xbf16>, vector<24x512xbf16>, vector<16x512xf32> -> vector<16x512xf32>
    %c0_3 = arith.constant 0 : index
    %c0_4 = arith.constant 0 : index
    %4 = vector.load %arg3[%c0_3, %c0_4] : memref<1x512xf32, #tpu.memory_space<vmem>>, vector<1x512xf32>
    %5 = vector.broadcast %4 : vector<1x512xf32> to vector<16x512xf32>
    %6 = arith.addf %3, %5 : vector<16x512xf32>
    %cst_5 = arith.constant 0.000000e+00 : f32
    %7 = vector.broadcast %cst_5 : f32 to vector<16x512xf32>
    %8 = arith.maximumf %6, %7 : vector<16x512xf32>
    %9 = arith.truncf %8 : vector<16x512xf32> to vector<16x512xbf16>
    %c0_6 = arith.constant 0 : index
    %c0_7 = arith.constant 0 : index
    %10 = vector.load %arg4[%c0_6, %c0_7] : memref<512x384xbf16, #tpu.memory_space<vmem>>, vector<512x384xbf16>
    %cst_8 = arith.constant dense<0.000000e+00> : vector<16x384xf32>
    %11 = tpu.matmul %9, %10, %cst_8 {dimension_numbers = #tpu.dot_dimension_numbers<[1], [0], [0], [1], [0, 0, 1, 1], [], []>} : vector<16x512xbf16>, vector<512x384xbf16>, vector<16x384xf32> -> vector<16x384xf32>
    %c0_9 = arith.constant 0 : index
    %c0_10 = arith.constant 0 : index
    %12 = vector.load %arg5[%c0_9, %c0_10] : memref<1x384xf32, #tpu.memory_space<vmem>>, vector<1x384xf32>
    %13 = vector.broadcast %12 : vector<1x384xf32> to vector<16x384xf32>
    %14 = arith.addf %11, %13 : vector<16x384xf32>
    %cst_11 = arith.constant 0.000000e+00 : f32
    %15 = vector.broadcast %cst_11 : f32 to vector<16x384xf32>
    %16 = arith.maximumf %14, %15 : vector<16x384xf32>
    %17 = arith.truncf %16 : vector<16x384xf32> to vector<16x384xbf16>
    %c0_12 = arith.constant 0 : index
    %c0_13 = arith.constant 0 : index
    %18 = vector.load %arg6[%c0_12, %c0_13] : memref<384x128xbf16, #tpu.memory_space<vmem>>, vector<384x128xbf16>
    %cst_14 = arith.constant dense<0.000000e+00> : vector<16x128xf32>
    %19 = tpu.matmul %17, %18, %cst_14 {dimension_numbers = #tpu.dot_dimension_numbers<[1], [0], [0], [1], [0, 0, 1, 1], [], []>} : vector<16x384xbf16>, vector<384x128xbf16>, vector<16x128xf32> -> vector<16x128xf32>
    %c0_15 = arith.constant 0 : index
    %c0_16 = arith.constant 0 : index
    %20 = vector.load %arg7[%c0_15, %c0_16] : memref<1x128xf32, #tpu.memory_space<vmem>>, vector<1x128xf32>
    %21 = vector.broadcast %20 : vector<1x128xf32> to vector<16x128xf32>
    %22 = arith.addf %19, %21 : vector<16x128xf32>
    %23 = math.tanh %22 : vector<16x128xf32>
    %cst_17 = arith.constant 2.000000e+00 : f32
    %24 = vector.broadcast %cst_17 : f32 to vector<16x128xf32>
    %25 = arith.mulf %24, %23 : vector<16x128xf32>
    %26 = arith.truncf %25 : vector<16x128xf32> to vector<16x128xbf16>
    %c0_18 = arith.constant 0 : index
    %c0_19 = arith.constant 0 : index
    %27 = vector.load %arg8[%c0_18, %c0_19] : memref<16x128xbf16, #tpu.memory_space<vmem>>, vector<16x128xbf16>
    tpu.vector_store %arg8[%c0_18, %c0_19], %26 {strides = array<i32>} : memref<16x128xbf16, #tpu.memory_space<vmem>>, vector<16x128xbf16>,
    return
  }
  func.func @transform_0(%arg0: i32) -> (i32, i32) {
    %c0_i32 = arith.constant 0 : i32
    %c0_i32_0 = arith.constant 0 : i32
    return %arg0, %c0_i32 : i32, i32
  }
  func.func @transform_1(%arg0: i32) -> (i32, i32) {
    %c0_i32 = arith.constant 0 : i32
    %c0_i32_0 = arith.constant 0 : i32
    %c0_i32_1 = arith.constant 0 : i32
    return %c0_i32, %c0_i32_0 : i32, i32
  }
  func.func @transform_2(%arg0: i32) -> (i32, i32) {
    %c0_i32 = arith.constant 0 : i32
    %c0_i32_0 = arith.constant 0 : i32
    %c0_i32_1 = arith.constant 0 : i32
    return %c0_i32, %c0_i32_0 : i32, i32
  }
  func.func @transform_3(%arg0: i32) -> (i32, i32) {
    %c0_i32 = arith.constant 0 : i32
    %c0_i32_0 = arith.constant 0 : i32
    %c0_i32_1 = arith.constant 0 : i32
    return %c0_i32, %c0_i32_0 : i32, i32
  }
  func.func @transform_4(%arg0: i32) -> (i32, i32) {
    %c0_i32 = arith.constant 0 : i32
    %c0_i32_0 = arith.constant 0 : i32
    %c0_i32_1 = arith.constant 0 : i32
    return %c0_i32, %c0_i32_0 : i32, i32
  }
  func.func @transform_5(%arg0: i32) -> (i32, i32) {
    %c0_i32 = arith.constant 0 : i32
    %c0_i32_0 = arith.constant 0 : i32
    %c0_i32_1 = arith.constant 0 : i32
    return %c0_i32, %c0_i32_0 : i32, i32
  }
  func.func @transform_6(%arg0: i32) -> (i32, i32) {
    %c0_i32 = arith.constant 0 : i32
    %c0_i32_0 = arith.constant 0 : i32
    %c0_i32_1 = arith.constant 0 : i32
    return %c0_i32, %c0_i32_0 : i32, i32
  }
  func.func @transform_7(%arg0: i32) -> (i32, i32) {
    %c0_i32 = arith.constant 0 : i32
    %c0_i32_0 = arith.constant 0 : i32
    return %arg0, %c0_i32 : i32, i32
  }
}

</mosaic_0001>

<llo_original>
// kernel: tpu_custom_call.1
$region0: #{tpu_custom_call.1}
  #allocation0 [shape = 'u32[]', space=smem, size = 0x4, offset = 0x4, fixed_abs, tag = 'smem constant byte address 0x4 - core index']
  #allocation1 [shape = 'u32[144,128]{1,0:T(1,128)}', space=vmem, size = 0x12000, scoped, tag = 'internal scratch']
  %s0 = inlined_call_operand.hbm [shape: f32[16,24], index: 0, kind: input, shape index: {}]
  %s1 = inlined_call_operand.hbm [shape: bf16[24,512], index: 1, kind: input, shape index: {}]
  %s2 = inlined_call_operand.hbm [shape: f32[1,512], index: 2, kind: input, shape index: {}]
  %s3 = inlined_call_operand.hbm [shape: bf16[512,384], index: 3, kind: input, shape index: {}]
  %s4 = inlined_call_operand.vmem [shape: f32[1,384], index: 4, kind: input, shape index: {}]
  %s5 = inlined_call_operand.hbm [shape: bf16[384,128], index: 5, kind: input, shape index: {}]
  %s6 = inlined_call_operand.vmem [shape: f32[1,128], index: 6, kind: input, shape index: {}]
  %s7 = inlined_call_operand.hbm [shape: bf16[16,128], index: 7, kind: output, shape index: {}]
  %s8 = sld [smem:[#allocation0]]
  $region58: #{tpu_custom_call.1} parent=0
    _
  %s10 = ssub.s32 1, %s8
  %s11 = scalar_select 0, %s10, %s8
  $region1: #{tpu_custom_call.1} parent=0
    #allocation2 [shape = 'u8[8192]{0}', space=vmem, size = 0x2000, scoped, tag = 'input window, operand 0, single buffered']
    #allocation3 [shape = 's32[1]{0}', space=sflag, size = 0x4, scoped, tag = 'scoped memory for tpu_custom_call.1']
    #allocation4 [shape = 's32[1]{0}', space=sflag, size = 0x4, scoped, tag = 'scoped memory for tpu_custom_call.1']
    #allocation5 [shape = 'u8[24576]{0}', space=vmem, size = 0x6000, scoped, tag = 'input window, operand 1, single buffered']
    #allocation6 [shape = 's32[1]{0}', space=sflag, size = 0x4, scoped, tag = 'scoped memory for tpu_custom_call.1']
    #allocation7 [shape = 'u8[2048]{0}', space=vmem, size = 0x800, scoped, tag = 'input window, operand 2, single buffered']
    #allocation8 [shape = 'u8[393216]{0}', space=vmem, size = 0x60000, scoped, tag = 'input window, operand 3, single buffered']
    #allocation9 [shape = 's32[1]{0}', space=sflag, size = 0x4, scoped, tag = 'scoped memory for tpu_custom_call.1']
    #allocation10 [shape = 'u8[98304]{0}', space=vmem, size = 0x18000, scoped, tag = 'input window, operand 5, single buffered']
    #allocation11 [shape = 'u8[4096]{0}', space=vmem, size = 0x1000, scoped, tag = 'output window, operand 0, single buffered']
    %12 = vsyncpa [#allocation3], 0
    %13 = vsyncpa [#allocation6], 0
    %14 = vsyncpa [#allocation9], 0
    %15 = vsyncpa [#allocation4], 0
    // Predicated region
    $region2: #{tpu_custom_call.1} parent=1 // pred_check
      _
    $region3: #{tpu_custom_call.1} parent=1 // pred_check_branch
      %17 = sbr.rel (0) target = $region5
    $region4: #{tpu_custom_call.1} parent=1 // pred_region
      %s19 = ssub.s32 256, 256
      %20 = vsyncadd [#allocation3], %s19
      %s21 = sshll.u32 [#allocation2], 4
      %s22 = int_to_ptr.vmem [resolvable:$true] %s21
      %27 = dma.hbm_to_vmem [thread:$0]  %s0, 256, %s22, [#allocation3], 128, 128, 8
    $region5: #{tpu_custom_call.1} parent=1 // pred_fallthru
      _
    // Predicated region
    $region6: #{tpu_custom_call.1} parent=1 // pred_check
      _
    $region7: #{tpu_custom_call.1} parent=1 // pred_check_branch
      %29 = sbr.rel (0) target = $region9
    $region8: #{tpu_custom_call.1} parent=1 // pred_region
      %s31 = ssub.s32 768, 768
      %32 = vsyncadd [#allocation6], %s31
      %s33 = sshll.u32 [#allocation5], 4
      %s34 = int_to_ptr.vmem [resolvable:$true] %s33
      %39 = dma.hbm_to_vmem [thread:$0]  %s1, 768, %s34, [#allocation6], 256, 256, 16
    $region9: #{tpu_custom_call.1} parent=1 // pred_fallthru
      _
    // Predicated region
    $region10: #{tpu_custom_call.1} parent=1 // pred_check
      _
    $region11: #{tpu_custom_call.1} parent=1 // pred_check_branch
      %41 = sbr.rel (0) target = $region13
    $region12: #{tpu_custom_call.1} parent=1 // pred_region
      %s43 = ssub.s32 64, 64
      %44 = vsyncadd [#allocation6], %s43
      %s46 = sshll.u32 [#allocation7], 4
      %s47 = int_to_ptr.vmem [resolvable:$true] %s46
      %49 = dma.hbm_to_vmem [thread:$0]  %s2, 64, %s47, [#allocation6]
    $region13: #{tpu_custom_call.1} parent=1 // pred_fallthru
      _
    // Predicated region
    $region14: #{tpu_custom_call.1} parent=1 // pred_check
      _
    $region15: #{tpu_custom_call.1} parent=1 // pred_check_branch
      %51 = sbr.rel (0) target = $region17
    $region16: #{tpu_custom_call.1} parent=1 // pred_region
      %s53 = ssub.s32 12288, 12288
      %54 = vsyncadd [#allocation9], %s53
      %s55 = sshll.u32 [#allocation8], 4
      %s56 = int_to_ptr.vmem [resolvable:$true] %s55
      %61 = dma.hbm_to_vmem [thread:$0]  %s3, 12288, %s56, [#allocation9], 192, 192, 12
    $region17: #{tpu_custom_call.1} parent=1 // pred_fallthru
      _
    // Predicated region
    $region18: #{tpu_custom_call.1} parent=1 // pred_check
      _
    $region19: #{tpu_custom_call.1} parent=1 // pred_check_branch
      %63 = sbr.rel (0) target = $region21
    $region20: #{tpu_custom_call.1} parent=1 // pred_region
      _
    $region21: #{tpu_custom_call.1} parent=1 // pred_fallthru
      _
    // Predicated region
    $region22: #{tpu_custom_call.1} parent=1 // pred_check
      _
    $region23: #{tpu_custom_call.1} parent=1 // pred_check_branch
      %65 = sbr.rel (0) target = $region25
    $region24: #{tpu_custom_call.1} parent=1 // pred_region
      %s67 = ssub.s32 3072, 3072
      %68 = vsyncadd [#allocation9], %s67
      %s69 = sshll.u32 [#allocation10], 4
      %s70 = int_to_ptr.vmem [resolvable:$true] %s69
      %75 = dma.hbm_to_vmem [thread:$0]  %s5, 3072, %s70, [#allocation9], 64, 64, 4
    $region25: #{tpu_custom_call.1} parent=1 // pred_fallthru
      _
    // Predicated region
    $region26: #{tpu_custom_call.1} parent=1 // pred_check
      _
    $region27: #{tpu_custom_call.1} parent=1 // pred_check_branch
      %77 = sbr.rel (0) target = $region29
    $region28: #{tpu_custom_call.1} parent=1 // pred_region
      _
    $region29: #{tpu_custom_call.1} parent=1 // pred_fallthru
      _
    // Predicated region
    $region30: #{tpu_custom_call.1} parent=1 // pred_check
      _
    $region31: #{tpu_custom_call.1} parent=1 // pred_check_branch
      %79 = sbr.rel (0) target = $region33
    $region32: #{tpu_custom_call.1} parent=1 // pred_region
      %80 = dma.done [#allocation3], 256
    $region33: #{tpu_custom_call.1} parent=1 // pred_fallthru
      _
    // Predicated region
    $region34: #{tpu_custom_call.1} parent=1 // pred_check
      _
    $region35: #{tpu_custom_call.1} parent=1 // pred_check_branch
      %82 = sbr.rel (0) target = $region37
    $region36: #{tpu_custom_call.1} parent=1 // pred_region
      %83 = dma.done [#allocation6], 768
    $region37: #{tpu_custom_call.1} parent=1 // pred_fallthru
      _
    // Predicated region
    $region38: #{tpu_custom_call.1} parent=1 // pred_check
      _
    $region39: #{tpu_custom_call.1} parent=1 // pred_check_branch
      %85 = sbr.rel (0) target = $region41
    $region40: #{tpu_custom_call.1} parent=1 // pred_region
      %86 = dma.done [#allocation6], 64
    $region41: #{tpu_custom_call.1} parent=1 // pred_fallthru
      _
    // Predicated region
    $region42: #{tpu_custom_call.1} parent=1 // pred_check
      _
    $region43: #{tpu_custom_call.1} parent=1 // pred_check_branch
      %88 = sbr.rel (0) target = $region45
    $region44: #{tpu_custom_call.1} parent=1 // pred_region
      %89 = dma.done [#allocation9], 12288
    $region45: #{tpu_custom_call.1} parent=1 // pred_fallthru
      _
    // Predicated region
    $region46: #{tpu_custom_call.1} parent=1 // pred_check
      _
    $region47: #{tpu_custom_call.1} parent=1 // pred_check_branch
      %91 = sbr.rel (0) target = $region49
    $region48: #{tpu_custom_call.1} parent=1 // pred_region
      %92 = dma.done [#allocation9], 3072
    $region49: #{tpu_custom_call.1} parent=1 // pred_fallthru
      _
    %v94 = vld [vmem:[#allocation2] sm:$0xff]
    %v95 = vld [vmem:[#allocation2 + $0x8] sm:$0xff]
    %v96 = vpack.c.bf16 %v95, %v94
    %v97 = vld [vmem:[#allocation5] sm:$0xff]
    %v98 = vld [vmem:[#allocation5 + $0x8] sm:$0xff]
    %v99 = vld [vmem:[#allocation5 + $0x10] sm:$0xff]
    %v100 = vld [vmem:[#allocation5 + $0x18] sm:$0xff]
    %v101 = vld [vmem:[#allocation5 + $0x20] sm:$0xff]
    %v102 = vld [vmem:[#allocation5 + $0x28] sm:$0xff]
    %v103 = vld [vmem:[#allocation7] sm:$0xf]
    %v105 = vlaneseq
    %v106 = vshrl.u32 %v105, 7
    %v107 = vsub.s32 0, %v106
    %v108 = vrot.slane %v103, %v107
    %v109 = vlaneseq
    %v110 = vshrl.u32 %v109, 7
    %v111 = vsub.s32 1, %v110
    %v112 = vrot.slane %v103, %v111
    %v113 = vlaneseq
    %v114 = vshrl.u32 %v113, 7
    %v115 = vsub.s32 2, %v114
    %v116 = vrot.slane %v103, %v115
    %v117 = vlaneseq
    %v118 = vshrl.u32 %v117, 7
    %v119 = vsub.s32 3, %v118
    %v120 = vrot.slane %v103, %v119
    %v131 = vunpack.c.l.b16 %v97
    %v132 = vunpack.c.h.b16 %v97
    %v133 = vunpack.c.l.b16 %v98
    %v134 = vunpack.c.h.b16 %v98
    %v135 = vunpack.c.l.b16 %v99
    %v136 = vunpack.c.h.b16 %v99
    %v137 = vunpack.c.l.b16 %v100
    %v138 = vunpack.c.h.b16 %v100
    %v139 = vunpack.c.l.b16 %v101
    %v140 = vunpack.c.h.b16 %v101
    %v141 = vunpack.c.l.b16 %v102
    %v142 = vunpack.c.h.b16 %v102
    %v143 = vpack.c.b16 %v135, %v131
    %v144 = vpack.c.b16 %v136, %v132
    %v145 = vpack.c.b16 %v137, %v133
    %v146 = vpack.c.b16 %v138, %v134
    %v147 = vpack.c.b16 %v139, %v139
    %v148 = vpack.c.b16 %v140, %v140
    %v149 = vpack.c.b16 %v141, %v141
    %v150 = vpack.c.b16 %v142, %v142
    %vm155 = vcmask 195584
    %v157 = vsel %vm155, %v96, 0
    %vm159 = vcmask 1043456
    %v161 = vsel %vm159, %v147, 0
    %v164 = vsel %vm159, %v148, 0
    %v167 = vsel %vm159, %v149, 0
    %v170 = vsel %vm159, %v150, 0
    %172 = vmatprep.subr.bf16.mxu0 0
    %173 = vmatpush1.bf16.msra.mxu0 0
    %174 = vmatprep.subr.bf16.mxu0 0
    %175 = vmatpush1.bf16.msra.mxu0 0
    %176 = vmatprep.subr.bf16.mxu0 0
    %177 = vmatpush1.bf16.msra.mxu0 0
    %178 = vmatprep.subr.bf16.mxu0 0
    %179 = vmatpush1.bf16.msra.mxu0 0
    %180 = vmatprep.subr.bf16.mxu0 0
    %181 = vmatpush1.bf16.msra.mxu0 0
    %182 = vmatprep.subr.bf16.mxu0 0
    %183 = vmatpush1.bf16.msra.mxu0 0
    %184 = vmatprep.subr.bf16.mxu0 %v164
    %185 = vmatpush1.bf16.msra.mxu0 %v161
    %186 = vmatprep.subr.bf16.mxu0 %v144
    %187 = vmatpush1.bf16.msra.mxu0 %v143
    %188 = vmatprep.subr.bf16.mxu0 0
    %189 = vmatpush2.bf16.msra.mxu0 0
    %190 = vmatprep.subr.bf16.mxu0 0
    %191 = vmatpush2.bf16.msra.mxu0 0
    %192 = vmatprep.subr.bf16.mxu0 0
    %193 = vmatpush2.bf16.msra.mxu0 0
    %194 = vmatprep.subr.bf16.mxu0 0
    %195 = vmatpush2.bf16.msra.mxu0 0
    %196 = vmatprep.subr.bf16.mxu0 0
    %197 = vmatpush2.bf16.msra.mxu0 0
    %198 = vmatprep.subr.bf16.mxu0 0
    %199 = vmatpush2.bf16.msra.mxu0 0
    %200 = vmatprep.subr.bf16.mxu0 0
    %201 = vmatpush2.bf16.msra.mxu0 0
    %202 = vmatprep.subr.bf16.mxu0 0
    %203 = vmatpush2.bf16.msra.mxu0 0
    %204 = vmatprep.mubr.bf16.mxu0 0
    %205 = vmatmul.mubr.bf16.gmra.mxu0 %v157
    %v206 = vpop.f32.mrf.mxu0
    %v207 = vadd.f32 %v108, %v206
    %v208 = vpop.f32.mrf.mxu0
    %v209 = vadd.f32 %v112, %v208
    %v210 = vpop.f32.mrf.mxu0
    %v211 = vadd.f32 %v108, %v210
    %v212 = vpop.f32.mrf.mxu0
    %v213 = vadd.f32 %v112, %v212
    %214 = vdwg.mxu0
    %215 = vmatprep.subr.bf16.mxu0 0
    %216 = vmatpush1.bf16.msra.mxu0 0
    %217 = vmatprep.subr.bf16.mxu0 0
    %218 = vmatpush1.bf16.msra.mxu0 0
    %219 = vmatprep.subr.bf16.mxu0 0
    %220 = vmatpush1.bf16.msra.mxu0 0
    %221 = vmatprep.subr.bf16.mxu0 0
    %222 = vmatpush1.bf16.msra.mxu0 0
    %223 = vmatprep.subr.bf16.mxu0 0
    %224 = vmatpush1.bf16.msra.mxu0 0
    %225 = vmatprep.subr.bf16.mxu0 0
    %226 = vmatpush1.bf16.msra.mxu0 0
    %227 = vmatprep.subr.bf16.mxu0 %v170
    %228 = vmatpush1.bf16.msra.mxu0 %v167
    %229 = vmatprep.subr.bf16.mxu0 %v146
    %230 = vmatpush1.bf16.msra.mxu0 %v145
    %231 = vmatprep.subr.bf16.mxu0 0
    %232 = vmatpush2.bf16.msra.mxu0 0
    %233 = vmatprep.subr.bf16.mxu0 0
    %234 = vmatpush2.bf16.msra.mxu0 0
    %235 = vmatprep.subr.bf16.mxu0 0
    %236 = vmatpush2.bf16.msra.mxu0 0
    %237 = vmatprep.subr.bf16.mxu0 0
    %238 = vmatpush2.bf16.msra.mxu0 0
    %239 = vmatprep.subr.bf16.mxu0 0
    %240 = vmatpush2.bf16.msra.mxu0 0
    %241 = vmatprep.subr.bf16.mxu0 0
    %242 = vmatpush2.bf16.msra.mxu0 0
    %243 = vmatprep.subr.bf16.mxu0 0
    %244 = vmatpush2.bf16.msra.mxu0 0
    %245 = vmatprep.subr.bf16.mxu0 0
    %246 = vmatpush2.bf16.msra.mxu0 0
    %247 = vmatprep.mubr.bf16.mxu0 0
    %248 = vmatmul.mubr.bf16.gmra.mxu0 %v157
    %v249 = vpop.f32.mrf.mxu0
    %v250 = vadd.f32 %v116, %v249
    %v251 = vpop.f32.mrf.mxu0
    %v252 = vadd.f32 %v120, %v251
    %v253 = vpop.f32.mrf.mxu0
    %v254 = vadd.f32 %v116, %v253
    %v255 = vpop.f32.mrf.mxu0
    %v256 = vadd.f32 %v120, %v255
    %257 = vdwg.mxu0
    %v258 = vmax.f32 %v207, 0.0
    %v259 = vmax.f32 %v209, 0.0
    %v260 = vmax.f32 %v250, 0.0
    %v261 = vmax.f32 %v252, 0.0
    %v262 = vmax.f32 %v211, 0.0
    %v263 = vmax.f32 %v213, 0.0
    %v264 = vmax.f32 %v254, 0.0
    %v265 = vmax.f32 %v256, 0.0
    %v266 = vpack.c.bf16 %v262, %v258
    %v267 = vpack.c.bf16 %v263, %v259
    %v268 = vpack.c.bf16 %v264, %v260
    %v269 = vpack.c.bf16 %v265, %v261
    %v270 = vld [vmem:[#allocation8] sm:$0xff]
    %v271 = vld [vmem:[#allocation8 + $0x8] sm:$0xf]
    %v272 = vld [vmem:[#allocation8 + $0xc] sm:$0xff]
    %v273 = vld [vmem:[#allocation8 + $0x14] sm:$0xf]
    %v274 = vld [vmem:[#allocation8 + $0x18] sm:$0xff]
    %v275 = vld [vmem:[#allocation8 + $0x20] sm:$0xf]
    %v276 = vld [vmem:[#allocation8 + $0x24] sm:$0xff]
    %v277 = vld [vmem:[#allocation8 + $0x2c] sm:$0xf]
    %v278 = vld [vmem:[#allocation8 + $0x30] sm:$0xff]
    %v279 = vld [vmem:[#allocation8 + $0x38] sm:$0xf]
    %v280 = vld [vmem:[#allocation8 + $0x3c] sm:$0xff]
    %v281 = vld [vmem:[#allocation8 + $0x44] sm:$0xf]
    %v282 = vld [vmem:[#allocation8 + $0x48] sm:$0xff]
    %v283 = vld [vmem:[#allocation8 + $0x50] sm:$0xf]
    %v284 = vld [vmem:[#allocation8 + $0x54] sm:$0xff]
    %v285 = vld [vmem:[#allocation8 + $0x5c] sm:$0xf]
    %v286 = vld [vmem:[#allocation8 + $0x60] sm:$0xff]
    %v287 = vld [vmem:[#allocation8 + $0x68] sm:$0xf]
    %v288 = vld [vmem:[#allocation8 + $0x6c] sm:$0xff]
    %v289 = vld [vmem:[#allocation8 + $0x74] sm:$0xf]
    %v290 = vld [vmem:[#allocation8 + $0x78] sm:$0xff]
    %v291 = vld [vmem:[#allocation8 + $0x80] sm:$0xf]
    %v292 = vld [vmem:[#allocation8 + $0x84] sm:$0xff]
    %v293 = vld [vmem:[#allocation8 + $0x8c] sm:$0xf]
    %v294 = vld [vmem:[#allocation8 + $0x90] sm:$0xff]
    %v295 = vld [vmem:[#allocation8 + $0x98] sm:$0xf]
    %v296 = vld [vmem:[#allocation8 + $0x9c] sm:$0xff]
    %v297 = vld [vmem:[#allocation8 + $0xa4] sm:$0xf]
    %v298 = vld [vmem:[#allocation8 + $0xa8] sm:$0xff]
    %v299 = vld [vmem:[#allocation8 + $0xb0] sm:$0xf]
    %v300 = vld [vmem:[#allocation8 + $0xb4] sm:$0xff]
    %v301 = vld [vmem:[#allocation8 + $0xbc] sm:$0xf]
    %v302 = vld [vmem:[#allocation8 + $0xc0] sm:$0xff]
    %v303 = vld [vmem:[#allocation8 + $0xc8] sm:$0xf]
    %v304 = vld [vmem:[#allocation8 + $0xcc] sm:$0xff]
    %v305 = vld [vmem:[#allocation8 + $0xd4] sm:$0xf]
    %v306 = vld [vmem:[#allocation8 + $0xd8] sm:$0xff]
    %v307 = vld [vmem:[#allocation8 + $0xe0] sm:$0xf]
    %v308 = vld [vmem:[#allocation8 + $0xe4] sm:$0xff]
    %v309 = vld [vmem:[#allocation8 + $0xec] sm:$0xf]
    %v310 = vld [vmem:[#allocation8 + $0xf0] sm:$0xff]
    %v311 = vld [vmem:[#allocation8 + $0xf8] sm:$0xf]
    %v312 = vld [vmem:[#allocation8 + $0xfc] sm:$0xff]
    %v313 = vld [vmem:[#allocation8 + $0x104] sm:$0xf]
    %v314 = vld [vmem:[#allocation8 + $0x108] sm:$0xff]
    %v315 = vld [vmem:[#allocation8 + $0x110] sm:$0xf]
    %v316 = vld [vmem:[#allocation8 + $0x114] sm:$0xff]
    %v317 = vld [vmem:[#allocation8 + $0x11c] sm:$0xf]
    %v318 = vld [vmem:[#allocation8 + $0x120] sm:$0xff]
    %v319 = vld [vmem:[#allocation8 + $0x128] sm:$0xf]
    %v320 = vld [vmem:[#allocation8 + $0x12c] sm:$0xff]
    %v321 = vld [vmem:[#allocation8 + $0x134] sm:$0xf]
    %v322 = vld [vmem:[#allocation8 + $0x138] sm:$0xff]
    %v323 = vld [vmem:[#allocation8 + $0x140] sm:$0xf]
    %v324 = vld [vmem:[#allocation8 + $0x144] sm:$0xff]
    %v325 = vld [vmem:[#allocation8 + $0x14c] sm:$0xf]
    %v326 = vld [vmem:[#allocation8 + $0x150] sm:$0xff]
    %v327 = vld [vmem:[#allocation8 + $0x158] sm:$0xf]
    %v328 = vld [vmem:[#allocation8 + $0x15c] sm:$0xff]
    %v329 = vld [vmem:[#allocation8 + $0x164] sm:$0xf]
    %v330 = vld [vmem:[#allocation8 + $0x168] sm:$0xff]
    %v331 = vld [vmem:[#allocation8 + $0x170] sm:$0xf]
    %v332 = vld [vmem:[#allocation8 + $0x174] sm:$0xff]
    %v333 = vld [vmem:[#allocation8 + $0x17c] sm:$0xf]
    %v334 = vld [vmem:[#allocation8 + $0x180] sm:$0xff]
    %v335 = vld [vmem:[#allocation8 + $0x188] sm:$0xf]
    %v336 = vld [vmem:[#allocation8 + $0x18c] sm:$0xff]
    %v337 = vld [vmem:[#allocation8 + $0x194] sm:$0xf]
    %v338 = vld [vmem:[#allocation8 + $0x198] sm:$0xff]
    %v339 = vld [vmem:[#allocation8 + $0x1a0] sm:$0xf]
    %v340 = vld [vmem:[#allocation8 + $0x1a4] sm:$0xff]
    %v341 = vld [vmem:[#allocation8 + $0x1ac] sm:$0xf]
    %v342 = vld [vmem:[#allocation8 + $0x1b0] sm:$0xff]
    %v343 = vld [vmem:[#allocation8 + $0x1b8] sm:$0xf]
    %v344 = vld [vmem:[#allocation8 + $0x1bc] sm:$0xff]
    %v345 = vld [vmem:[#allocation8 + $0x1c4] sm:$0xf]
    %v346 = vld [vmem:[#allocation8 + $0x1c8] sm:$0xff]
    %v347 = vld [vmem:[#allocation8 + $0x1d0] sm:$0xf]
    %v348 = vld [vmem:[#allocation8 + $0x1d4] sm:$0xff]
    %v349 = vld [vmem:[#allocation8 + $0x1dc] sm:$0xf]
    %v350 = vld [vmem:[#allocation8 + $0x1e0] sm:$0xff]
    %v351 = vld [vmem:[#allocation8 + $0x1e8] sm:$0xf]
    %v352 = vld [vmem:[#allocation8 + $0x1ec] sm:$0xff]
    %v353 = vld [vmem:[#allocation8 + $0x1f4] sm:$0xf]
    %v354 = vld [vmem:[#allocation8 + $0x1f8] sm:$0xff]
    %v355 = vld [vmem:[#allocation8 + $0x200] sm:$0xf]
    %v356 = vld [vmem:[#allocation8 + $0x204] sm:$0xff]
    %v357 = vld [vmem:[#allocation8 + $0x20c] sm:$0xf]
    %v358 = vld [vmem:[#allocation8 + $0x210] sm:$0xff]
    %v359 = vld [vmem:[#allocation8 + $0x218] sm:$0xf]
    %v360 = vld [vmem:[#allocation8 + $0x21c] sm:$0xff]
    %v361 = vld [vmem:[#allocation8 + $0x224] sm:$0xf]
    %v362 = vld [vmem:[#allocation8 + $0x228] sm:$0xff]
    %v363 = vld [vmem:[#allocation8 + $0x230] sm:$0xf]
    %v364 = vld [vmem:[#allocation8 + $0x234] sm:$0xff]
    %v365 = vld [vmem:[#allocation8 + $0x23c] sm:$0xf]
    %v366 = vld [vmem:[#allocation8 + $0x240] sm:$0xff]
    %v367 = vld [vmem:[#allocation8 + $0x248] sm:$0xf]
    %v368 = vld [vmem:[#allocation8 + $0x24c] sm:$0xff]
    %v369 = vld [vmem:[#allocation8 + $0x254] sm:$0xf]
    %v370 = vld [vmem:[#allocation8 + $0x258] sm:$0xff]
    %v371 = vld [vmem:[#allocation8 + $0x260] sm:$0xf]
    %v372 = vld [vmem:[#allocation8 + $0x264] sm:$0xff]
    %v373 = vld [vmem:[#allocation8 + $0x26c] sm:$0xf]
    %v374 = vld [vmem:[#allocation8 + $0x270] sm:$0xff]
    %v375 = vld [vmem:[#allocation8 + $0x278] sm:$0xf]
    %v376 = vld [vmem:[#allocation8 + $0x27c] sm:$0xff]
    %v377 = vld [vmem:[#allocation8 + $0x284] sm:$0xf]
    %v378 = vld [vmem:[#allocation8 + $0x288] sm:$0xff]
    %v379 = vld [vmem:[#allocation8 + $0x290] sm:$0xf]
    %v380 = vld [vmem:[#allocation8 + $0x294] sm:$0xff]
    %v381 = vld [vmem:[#allocation8 + $0x29c] sm:$0xf]
    %v382 = vld [vmem:[#allocation8 + $0x2a0] sm:$0xff]
    %v383 = vld [vmem:[#allocation8 + $0x2a8] sm:$0xf]
    %v384 = vld [vmem:[#allocation8 + $0x2ac] sm:$0xff]
    %v385 = vld [vmem:[#allocation8 + $0x2b4] sm:$0xf]
    %v386 = vld [vmem:[#allocation8 + $0x2b8] sm:$0xff]
    %v387 = vld [vmem:[#allocation8 + $0x2c0] sm:$0xf]
    %v388 = vld [vmem:[#allocation8 + $0x2c4] sm:$0xff]
    %v389 = vld [vmem:[#allocation8 + $0x2cc] sm:$0xf]
    %v390 = vld [vmem:[#allocation8 + $0x2d0] sm:$0xff]
    %v391 = vld [vmem:[#allocation8 + $0x2d8] sm:$0xf]
    %v392 = vld [vmem:[#allocation8 + $0x2dc] sm:$0xff]
    %v393 = vld [vmem:[#allocation8 + $0x2e4] sm:$0xf]
    %v394 = vld [vmem:[#allocation8 + $0x2e8] sm:$0xff]
    %v395 = vld [vmem:[#allocation8 + $0x2f0] sm:$0xf]
    %v396 = vld [vmem:[#allocation8 + $0x2f4] sm:$0xff]
    %v397 = vld [vmem:[#allocation8 + $0x2fc] sm:$0xf]
    %v398 = vld [vmem:[%s4] sm:$0x7]
    %v400 = vlaneseq
    %v401 = vshrl.u32 %v400, 7
    %v402 = vsub.s32 0, %v401
    %v403 = vrot.slane %v398, %v402
    %v404 = vlaneseq
    %v405 = vshrl.u32 %v404, 7
    %v406 = vsub.s32 1, %v405
    %v407 = vrot.slane %v398, %v406
    %v408 = vlaneseq
    %v409 = vshrl.u32 %v408, 7
    %v410 = vsub.s32 2, %v409
    %v411 = vrot.slane %v398, %v410
    %v543 = vunpack.c.l.b16 %v270
    %v544 = vunpack.c.h.b16 %v270
    %v545 = vunpack.c.l.b16 %v271
    %v546 = vunpack.c.l.b16 %v272
    %v547 = vunpack.c.h.b16 %v272
    %v548 = vunpack.c.l.b16 %v273
    %v549 = vunpack.c.l.b16 %v274
    %v550 = vunpack.c.h.b16 %v274
    %v551 = vunpack.c.l.b16 %v275
    %v552 = vunpack.c.l.b16 %v276
    %v553 = vunpack.c.h.b16 %v276
    %v554 = vunpack.c.l.b16 %v277
    %v555 = vunpack.c.l.b16 %v278
    %v556 = vunpack.c.h.b16 %v278
    %v557 = vunpack.c.l.b16 %v279
    %v558 = vunpack.c.l.b16 %v280
    %v559 = vunpack.c.h.b16 %v280
    %v560 = vunpack.c.l.b16 %v281
    %v561 = vunpack.c.l.b16 %v282
    %v562 = vunpack.c.h.b16 %v282
    %v563 = vunpack.c.l.b16 %v283
    %v564 = vunpack.c.l.b16 %v284
    %v565 = vunpack.c.h.b16 %v284
    %v566 = vunpack.c.l.b16 %v285
    %v567 = vunpack.c.l.b16 %v286
    %v568 = vunpack.c.h.b16 %v286
    %v569 = vunpack.c.l.b16 %v287
    %v570 = vunpack.c.l.b16 %v288
    %v571 = vunpack.c.h.b16 %v288
    %v572 = vunpack.c.l.b16 %v289
    %v573 = vunpack.c.l.b16 %v290
    %v574 = vunpack.c.h.b16 %v290
    %v575 = vunpack.c.l.b16 %v291
    %v576 = vunpack.c.l.b16 %v292
    %v577 = vunpack.c.h.b16 %v292
    %v578 = vunpack.c.l.b16 %v293
    %v579 = vunpack.c.l.b16 %v294
    %v580 = vunpack.c.h.b16 %v294
    %v581 = vunpack.c.l.b16 %v295
    %v582 = vunpack.c.l.b16 %v296
    %v583 = vunpack.c.h.b16 %v296
    %v584 = vunpack.c.l.b16 %v297
    %v585 = vunpack.c.l.b16 %v298
    %v586 = vunpack.c.h.b16 %v298
    %v587 = vunpack.c.l.b16 %v299
    %v588 = vunpack.c.l.b16 %v300
    %v589 = vunpack.c.h.b16 %v300
    %v590 = vunpack.c.l.b16 %v301
    %v591 = vunpack.c.l.b16 %v302
    %v592 = vunpack.c.h.b16 %v302
    %v593 = vunpack.c.l.b16 %v303
    %v594 = vunpack.c.l.b16 %v304
    %v595 = vunpack.c.h.b16 %v304
    %v596 = vunpack.c.l.b16 %v305
    %v597 = vunpack.c.l.b16 %v306
    %v598 = vunpack.c.h.b16 %v306
    %v599 = vunpack.c.l.b16 %v307
    %v600 = vunpack.c.l.b16 %v308
    %v601 = vunpack.c.h.b16 %v308
    %v602 = vunpack.c.l.b16 %v309
    %v603 = vunpack.c.l.b16 %v310
    %v604 = vunpack.c.h.b16 %v310
    %v605 = vunpack.c.l.b16 %v311
    %v606 = vunpack.c.l.b16 %v312
    %v607 = vunpack.c.h.b16 %v312
    %v608 = vunpack.c.l.b16 %v313
    %v609 = vunpack.c.l.b16 %v314
    %v610 = vunpack.c.h.b16 %v314
    %v611 = vunpack.c.l.b16 %v315
    %v612 = vunpack.c.l.b16 %v316
    %v613 = vunpack.c.h.b16 %v316
    %v614 = vunpack.c.l.b16 %v317
    %v615 = vunpack.c.l.b16 %v318
    %v616 = vunpack.c.h.b16 %v318
    %v617 = vunpack.c.l.b16 %v319
    %v618 = vunpack.c.l.b16 %v320
    %v619 = vunpack.c.h.b16 %v320
    %v620 = vunpack.c.l.b16 %v321
    %v621 = vunpack.c.l.b16 %v322
    %v622 = vunpack.c.h.b16 %v322
    %v623 = vunpack.c.l.b16 %v323
    %v624 = vunpack.c.l.b16 %v324
    %v625 = vunpack.c.h.b16 %v324
    %v626 = vunpack.c.l.b16 %v325
    %v627 = vunpack.c.l.b16 %v326
    %v628 = vunpack.c.h.b16 %v326
    %v629 = vunpack.c.l.b16 %v327
    %v630 = vunpack.c.l.b16 %v328
    %v631 = vunpack.c.h.b16 %v328
    %v632 = vunpack.c.l.b16 %v329
    %v633 = vunpack.c.l.b16 %v330
    %v634 = vunpack.c.h.b16 %v330
    %v635 = vunpack.c.l.b16 %v331
    %v636 = vunpack.c.l.b16 %v332
    %v637 = vunpack.c.h.b16 %v332
    %v638 = vunpack.c.l.b16 %v333
    %v639 = vunpack.c.l.b16 %v334
    %v640 = vunpack.c.h.b16 %v334
    %v641 = vunpack.c.l.b16 %v335
    %v642 = vunpack.c.l.b16 %v336
    %v643 = vunpack.c.h.b16 %v336
    %v644 = vunpack.c.l.b16 %v337
    %v645 = vunpack.c.l.b16 %v338
    %v646 = vunpack.c.h.b16 %v338
    %v647 = vunpack.c.l.b16 %v339
    %v648 = vunpack.c.l.b16 %v340
    %v649 = vunpack.c.h.b16 %v340
    %v650 = vunpack.c.l.b16 %v341
    %v651 = vunpack.c.l.b16 %v342
    %v652 = vunpack.c.h.b16 %v342
    %v653 = vunpack.c.l.b16 %v343
    %v654 = vunpack.c.l.b16 %v344
    %v655 = vunpack.c.h.b16 %v344
    %v656 = vunpack.c.l.b16 %v345
    %v657 = vunpack.c.l.b16 %v346
    %v658 = vunpack.c.h.b16 %v346
    %v659 = vunpack.c.l.b16 %v347
    %v660 = vunpack.c.l.b16 %v348
    %v661 = vunpack.c.h.b16 %v348
    %v662 = vunpack.c.l.b16 %v349
    %v663 = vunpack.c.l.b16 %v350
    %v664 = vunpack.c.h.b16 %v350
    %v665 = vunpack.c.l.b16 %v351
    %v666 = vunpack.c.l.b16 %v352
    %v667 = vunpack.c.h.b16 %v352
    %v668 = vunpack.c.l.b16 %v353
    %v669 = vunpack.c.l.b16 %v354
    %v670 = vunpack.c.h.b16 %v354
    %v671 = vunpack.c.l.b16 %v355
    %v672 = vunpack.c.l.b16 %v356
    %v673 = vunpack.c.h.b16 %v356
    %v674 = vunpack.c.l.b16 %v357
    %v675 = vunpack.c.l.b16 %v358
    %v676 = vunpack.c.h.b16 %v358
    %v677 = vunpack.c.l.b16 %v359
    %v678 = vunpack.c.l.b16 %v360
    %v679 = vunpack.c.h.b16 %v360
    %v680 = vunpack.c.l.b16 %v361
    %v681 = vunpack.c.l.b16 %v362
    %v682 = vunpack.c.h.b16 %v362
    %v683 = vunpack.c.l.b16 %v363
    %v684 = vunpack.c.l.b16 %v364
    %v685 = vunpack.c.h.b16 %v364
    %v686 = vunpack.c.l.b16 %v365
    %v687 = vunpack.c.l.b16 %v366
    %v688 = vunpack.c.h.b16 %v366
    %v689 = vunpack.c.l.b16 %v367
    %v690 = vunpack.c.l.b16 %v368
    %v691 = vunpack.c.h.b16 %v368
    %v692 = vunpack.c.l.b16 %v369
    %v693 = vunpack.c.l.b16 %v370
    %v694 = vunpack.c.h.b16 %v370
    %v695 = vunpack.c.l.b16 %v371
    %v696 = vunpack.c.l.b16 %v372
    %v697 = vunpack.c.h.b16 %v372
    %v698 = vunpack.c.l.b16 %v373
    %v699 = vunpack.c.l.b16 %v374
    %v700 = vunpack.c.h.b16 %v374
    %v701 = vunpack.c.l.b16 %v375
    %v702 = vunpack.c.l.b16 %v376
    %v703 = vunpack.c.h.b16 %v376
    %v704 = vunpack.c.l.b16 %v377
    %v705 = vunpack.c.l.b16 %v378
    %v706 = vunpack.c.h.b16 %v378
    %v707 = vunpack.c.l.b16 %v379
    %v708 = vunpack.c.l.b16 %v380
    %v709 = vunpack.c.h.b16 %v380
    %v710 = vunpack.c.l.b16 %v381
    %v711 = vunpack.c.l.b16 %v382
    %v712 = vunpack.c.h.b16 %v382
    %v713 = vunpack.c.l.b16 %v383
    %v714 = vunpack.c.l.b16 %v384
    %v715 = vunpack.c.h.b16 %v384
    %v716 = vunpack.c.l.b16 %v385
    %v717 = vunpack.c.l.b16 %v386
    %v718 = vunpack.c.h.b16 %v386
    %v719 = vunpack.c.l.b16 %v387
    %v720 = vunpack.c.l.b16 %v388
    %v721 = vunpack.c.h.b16 %v388
    %v722 = vunpack.c.l.b16 %v389
    %v723 = vunpack.c.l.b16 %v390
    %v724 = vunpack.c.h.b16 %v390
    %v725 = vunpack.c.l.b16 %v391
    %v726 = vunpack.c.l.b16 %v392
    %v727 = vunpack.c.h.b16 %v392
    %v728 = vunpack.c.l.b16 %v393
    %v729 = vunpack.c.l.b16 %v394
    %v730 = vunpack.c.h.b16 %v394
    %v731 = vunpack.c.l.b16 %v395
    %v732 = vunpack.c.l.b16 %v396
    %v733 = vunpack.c.h.b16 %v396
    %v734 = vunpack.c.l.b16 %v397
    %v735 = vpack.c.b16 %v546, %v543
    %v736 = vpack.c.b16 %v547, %v544
    %v737 = vpack.c.b16 %v548, %v545
    %v738 = vpack.c.b16 %v552, %v549
    %v739 = vpack.c.b16 %v553, %v550
    %v740 = vpack.c.b16 %v554, %v551
    %v741 = vpack.c.b16 %v558, %v555
    %v742 = vpack.c.b16 %v559, %v556
    %v743 = vpack.c.b16 %v560, %v557
    %v744 = vpack.c.b16 %v564, %v561
    %v745 = vpack.c.b16 %v565, %v562
    %v746 = vpack.c.b16 %v566, %v563
    %v747 = vpack.c.b16 %v570, %v567
    %v748 = vpack.c.b16 %v571, %v568
    %v749 = vpack.c.b16 %v572, %v569
    %v750 = vpack.c.b16 %v576, %v573
    %v751 = vpack.c.b16 %v577, %v574
    %v752 = vpack.c.b16 %v578, %v575
    %v753 = vpack.c.b16 %v582, %v579
    %v754 = vpack.c.b16 %v583, %v580
    %v755 = vpack.c.b16 %v584, %v581
    %v756 = vpack.c.b16 %v588, %v585
    %v757 = vpack.c.b16 %v589, %v586
    %v758 = vpack.c.b16 %v590, %v587
    %v759 = vpack.c.b16 %v594, %v591
    %v760 = vpack.c.b16 %v595, %v592
    %v761 = vpack.c.b16 %v596, %v593
    %v762 = vpack.c.b16 %v600, %v597
    %v763 = vpack.c.b16 %v601, %v598
    %v764 = vpack.c.b16 %v602, %v599
    %v765 = vpack.c.b16 %v606, %v603
    %v766 = vpack.c.b16 %v607, %v604
    %v767 = vpack.c.b16 %v608, %v605
    %v768 = vpack.c.b16 %v612, %v609
    %v769 = vpack.c.b16 %v613, %v610
    %v770 = vpack.c.b16 %v614, %v611
    %v771 = vpack.c.b16 %v618, %v615
    %v772 = vpack.c.b16 %v619, %v616
    %v773 = vpack.c.b16 %v620, %v617
    %v774 = vpack.c.b16 %v624, %v621
    %v775 = vpack.c.b16 %v625, %v622
    %v776 = vpack.c.b16 %v626, %v623
    %v777 = vpack.c.b16 %v630, %v627
    %v778 = vpack.c.b16 %v631, %v628
    %v779 = vpack.c.b16 %v632, %v629
    %v780 = vpack.c.b16 %v636, %v633
    %v781 = vpack.c.b16 %v637, %v634
    %v782 = vpack.c.b16 %v638, %v635
    %v783 = vpack.c.b16 %v642, %v639
    %v784 = vpack.c.b16 %v643, %v640
    %v785 = vpack.c.b16 %v644, %v641
    %v786 = vpack.c.b16 %v648, %v645
    %v787 = vpack.c.b16 %v649, %v646
    %v788 = vpack.c.b16 %v650, %v647
    %v789 = vpack.c.b16 %v654, %v651
    %v790 = vpack.c.b16 %v655, %v652
    %v791 = vpack.c.b16 %v656, %v653
    %v792 = vpack.c.b16 %v660, %v657
    %v793 = vpack.c.b16 %v661, %v658
    %v794 = vpack.c.b16 %v662, %v659
    %v795 = vpack.c.b16 %v666, %v663
    %v796 = vpack.c.b16 %v667, %v664
    %v797 = vpack.c.b16 %v668, %v665
    %v798 = vpack.c.b16 %v672, %v669
    %v799 = vpack.c.b16 %v673, %v670
    %v800 = vpack.c.b16 %v674, %v671
    %v801 = vpack.c.b16 %v678, %v675
    %v802 = vpack.c.b16 %v679, %v676
    %v803 = vpack.c.b16 %v680, %v677
    %v804 = vpack.c.b16 %v684, %v681
    %v805 = vpack.c.b16 %v685, %v682
    %v806 = vpack.c.b16 %v686, %v683
    %v807 = vpack.c.b16 %v690, %v687
    %v808 = vpack.c.b16 %v691, %v688
    %v809 = vpack.c.b16 %v692, %v689
    %v810 = vpack.c.b16 %v696, %v693
    %v811 = vpack.c.b16 %v697, %v694
    %v812 = vpack.c.b16 %v698, %v695
    %v813 = vpack.c.b16 %v702, %v699
    %v814 = vpack.c.b16 %v703, %v700
    %v815 = vpack.c.b16 %v704, %v701
    %v816 = vpack.c.b16 %v708, %v705
    %v817 = vpack.c.b16 %v709, %v706
    %v818 = vpack.c.b16 %v710, %v707
    %v819 = vpack.c.b16 %v714, %v711
    %v820 = vpack.c.b16 %v715, %v712
    %v821 = vpack.c.b16 %v716, %v713
    %v822 = vpack.c.b16 %v720, %v717
    %v823 = vpack.c.b16 %v721, %v718
    %v824 = vpack.c.b16 %v722, %v719
    %v825 = vpack.c.b16 %v726, %v723
    %v826 = vpack.c.b16 %v727, %v724
    %v827 = vpack.c.b16 %v728, %v725
    %v828 = vpack.c.b16 %v732, %v729
    %v829 = vpack.c.b16 %v733, %v730
    %v830 = vpack.c.b16 %v734, %v731
    %927 = vmatprep.subr.bf16.mxu0 %v757
    %928 = vmatpush1.bf16.msra.mxu0 %v756
    %929 = vmatprep.subr.bf16.mxu0 %v754
    %930 = vmatpush1.bf16.msra.mxu0 %v753
    %931 = vmatprep.subr.bf16.mxu0 %v751
    %932 = vmatpush1.bf16.msra.mxu0 %v750
    %933 = vmatprep.subr.bf16.mxu0 %v748
    %934 = vmatpush1.bf16.msra.mxu0 %v747
    %935 = vmatprep.subr.bf16.mxu0 %v745
    %936 = vmatpush1.bf16.msra.mxu0 %v744
    %937 = vmatprep.subr.bf16.mxu0 %v742
    %938 = vmatpush1.bf16.msra.mxu0 %v741
    %939 = vmatprep.subr.bf16.mxu0 %v739
    %940 = vmatpush1.bf16.msra.mxu0 %v738
    %941 = vmatprep.subr.bf16.mxu0 %v736
    %942 = vmatpush1.bf16.msra.mxu0 %v735
    %943 = vmatprep.subr.bf16.mxu0 %v781
    %944 = vmatpush2.bf16.msra.mxu0 %v780
    %945 = vmatprep.subr.bf16.mxu0 %v778
    %946 = vmatpush2.bf16.msra.mxu0 %v777
    %947 = vmatprep.subr.bf16.mxu0 %v775
    %948 = vmatpush2.bf16.msra.mxu0 %v774
    %949 = vmatprep.subr.bf16.mxu0 %v772
    %950 = vmatpush2.bf16.msra.mxu0 %v771
    %951 = vmatprep.subr.bf16.mxu0 %v769
    %952 = vmatpush2.bf16.msra.mxu0 %v768
    %953 = vmatprep.subr.bf16.mxu0 %v766
    %954 = vmatpush2.bf16.msra.mxu0 %v765
    %955 = vmatprep.subr.bf16.mxu0 %v763
    %956 = vmatpush2.bf16.msra.mxu0 %v762
    %957 = vmatprep.subr.bf16.mxu0 %v760
    %958 = vmatpush2.bf16.msra.mxu0 %v759
    %959 = vmatprep.mubr.bf16.mxu0 %v267
    %960 = vmatmul.mubr.bf16.gmra.mxu0 %v266
    %v961 = vpop.f32.mrf.mxu0
    %v962 = vadd.f32 %v403, %v961
    %v963 = vpop.f32.mrf.mxu0
    %v964 = vadd.f32 %v407, %v963
    %v965 = vpop.f32.mrf.mxu0
    %v966 = vadd.f32 %v403, %v965
    %v967 = vpop.f32.mrf.mxu0
    %v968 = vadd.f32 %v407, %v967
    %969 = vdwg.mxu0
    %970 = vmatprep.subr.bf16.mxu0 %v805
    %971 = vmatpush1.bf16.msra.mxu0 %v804
    %972 = vmatprep.subr.bf16.mxu0 %v802
    %973 = vmatpush1.bf16.msra.mxu0 %v801
    %974 = vmatprep.subr.bf16.mxu0 %v799
    %975 = vmatpush1.bf16.msra.mxu0 %v798
    %976 = vmatprep.subr.bf16.mxu0 %v796
    %977 = vmatpush1.bf16.msra.mxu0 %v795
    %978 = vmatprep.subr.bf16.mxu0 %v793
    %979 = vmatpush1.bf16.msra.mxu0 %v792
    %980 = vmatprep.subr.bf16.mxu0 %v790
    %981 = vmatpush1.bf16.msra.mxu0 %v789
    %982 = vmatprep.subr.bf16.mxu0 %v787
    %983 = vmatpush1.bf16.msra.mxu0 %v786
    %984 = vmatprep.subr.bf16.mxu0 %v784
    %985 = vmatpush1.bf16.msra.mxu0 %v783
    %986 = vmatprep.subr.bf16.mxu0 %v829
    %987 = vmatpush2.bf16.msra.mxu0 %v828
    %988 = vmatprep.subr.bf16.mxu0 %v826
    %989 = vmatpush2.bf16.msra.mxu0 %v825
    %990 = vmatprep.subr.bf16.mxu0 %v823
    %991 = vmatpush2.bf16.msra.mxu0 %v822
    %992 = vmatprep.subr.bf16.mxu0 %v820
    %993 = vmatpush2.bf16.msra.mxu0 %v819
    %994 = vmatprep.subr.bf16.mxu0 %v817
    %995 = vmatpush2.bf16.msra.mxu0 %v816
    %996 = vmatprep.subr.bf16.mxu0 %v814
    %997 = vmatpush2.bf16.msra.mxu0 %v813
    %998 = vmatprep.subr.bf16.mxu0 %v811
    %999 = vmatpush2.bf16.msra.mxu0 %v810
    %1000 = vmatprep.subr.bf16.mxu0 %v808
    %1001 = vmatpush2.bf16.msra.mxu0 %v807
    %1002 = vmatprep.mubr.bf16.mxu0 %v269
    %1003 = vmatmul.mubr.bf16.gmra.mxu0 %v268
    %v1004 = vpop.f32.mrf.mxu0
    %v1005 = vadd.f32 %v962, %v1004
    %v1006 = vpop.f32.mrf.mxu0
    %v1007 = vadd.f32 %v964, %v1006
    %v1008 = vpop.f32.mrf.mxu0
    %v1009 = vadd.f32 %v966, %v1008
    %v1010 = vpop.f32.mrf.mxu0
    %v1011 = vadd.f32 %v968, %v1010
    %1012 = vdwg.mxu0
    %1013 = vmatprep.subr.bf16.mxu0 0
    %1014 = vmatpush1.bf16.msra.mxu0 %v758
    %1015 = vmatprep.subr.bf16.mxu0 0
    %1016 = vmatpush1.bf16.msra.mxu0 %v755
    %1017 = vmatprep.subr.bf16.mxu0 0
    %1018 = vmatpush1.bf16.msra.mxu0 %v752
    %1019 = vmatprep.subr.bf16.mxu0 0
    %1020 = vmatpush1.bf16.msra.mxu0 %v749
    %1021 = vmatprep.subr.bf16.mxu0 0
    %1022 = vmatpush1.bf16.msra.mxu0 %v746
    %1023 = vmatprep.subr.bf16.mxu0 0
    %1024 = vmatpush1.bf16.msra.mxu0 %v743
    %1025 = vmatprep.subr.bf16.mxu0 0
    %1026 = vmatpush1.bf16.msra.mxu0 %v740
    %1027 = vmatprep.subr.bf16.mxu0 0
    %1028 = vmatpush1.bf16.msra.mxu0 %v737
    %1029 = vmatprep.subr.bf16.mxu0 0
    %1030 = vmatpush2.bf16.msra.mxu0 %v782
    %1031 = vmatprep.subr.bf16.mxu0 0
    %1032 = vmatpush2.bf16.msra.mxu0 %v779
    %1033 = vmatprep.subr.bf16.mxu0 0
    %1034 = vmatpush2.bf16.msra.mxu0 %v776
    %1035 = vmatprep.subr.bf16.mxu0 0
    %1036 = vmatpush2.bf16.msra.mxu0 %v773
    %1037 = vmatprep.subr.bf16.mxu0 0
    %1038 = vmatpush2.bf16.msra.mxu0 %v770
    %1039 = vmatprep.subr.bf16.mxu0 0
    %1040 = vmatpush2.bf16.msra.mxu0 %v767
    %1041 = vmatprep.subr.bf16.mxu0 0
    %1042 = vmatpush2.bf16.msra.mxu0 %v764
    %1043 = vmatprep.subr.bf16.mxu0 0
    %1044 = vmatpush2.bf16.msra.mxu0 %v761
    %1045 = vmatprep.mubr.bf16.mxu0 %v267
    %1046 = vmatmul.mubr.bf16.gmra.mxu0 %v266
    %v1047 = vpop.f32.mrf.mxu0
    %v1048 = vadd.f32 %v411, %v1047
    %v1049 = vpop.f32.mrf.mxu0
    %v1050 = vpop.f32.mrf.mxu0
    %v1051 = vadd.f32 %v411, %v1050
    %v1052 = vpop.f32.mrf.mxu0
    %1053 = vdwg.mxu0
    %1054 = vmatprep.subr.bf16.mxu0 0
    %1055 = vmatpush1.bf16.msra.mxu0 %v806
    %1056 = vmatprep.subr.bf16.mxu0 0
    %1057 = vmatpush1.bf16.msra.mxu0 %v803
    %1058 = vmatprep.subr.bf16.mxu0 0
    %1059 = vmatpush1.bf16.msra.mxu0 %v800
    %1060 = vmatprep.subr.bf16.mxu0 0
    %1061 = vmatpush1.bf16.msra.mxu0 %v797
    %1062 = vmatprep.subr.bf16.mxu0 0
    %1063 = vmatpush1.bf16.msra.mxu0 %v794
    %1064 = vmatprep.subr.bf16.mxu0 0
    %1065 = vmatpush1.bf16.msra.mxu0 %v791
    %1066 = vmatprep.subr.bf16.mxu0 0
    %1067 = vmatpush1.bf16.msra.mxu0 %v788
    %1068 = vmatprep.subr.bf16.mxu0 0
    %1069 = vmatpush1.bf16.msra.mxu0 %v785
    %1070 = vmatprep.subr.bf16.mxu0 0
    %1071 = vmatpush2.bf16.msra.mxu0 %v830
    %1072 = vmatprep.subr.bf16.mxu0 0
    %1073 = vmatpush2.bf16.msra.mxu0 %v827
    %1074 = vmatprep.subr.bf16.mxu0 0
    %1075 = vmatpush2.bf16.msra.mxu0 %v824
    %1076 = vmatprep.subr.bf16.mxu0 0
    %1077 = vmatpush2.bf16.msra.mxu0 %v821
    %1078 = vmatprep.subr.bf16.mxu0 0
    %1079 = vmatpush2.bf16.msra.mxu0 %v818
    %1080 = vmatprep.subr.bf16.mxu0 0
    %1081 = vmatpush2.bf16.msra.mxu0 %v815
    %1082 = vmatprep.subr.bf16.mxu0 0
    %1083 = vmatpush2.bf16.msra.mxu0 %v812
    %1084 = vmatprep.subr.bf16.mxu0 0
    %1085 = vmatpush2.bf16.msra.mxu0 %v809
    %1086 = vmatprep.mubr.bf16.mxu0 %v269
    %1087 = vmatmul.mubr.bf16.gmra.mxu0 %v268
    %v1088 = vpop.f32.mrf.mxu0
    %v1089 = vadd.f32 %v1048, %v1088
    %v1090 = vpop.f32.mrf.mxu0
    %v1091 = vpop.f32.mrf.mxu0
    %v1092 = vadd.f32 %v1051, %v1091
    %v1093 = vpop.f32.mrf.mxu0
    %1094 = vdwg.mxu0
    %v1095 = vmax.f32 %v1005, 0.0
    %v1096 = vmax.f32 %v1007, 0.0
    %v1097 = vmax.f32 %v1089, 0.0
    %v1098 = vmax.f32 %v1009, 0.0
    %v1099 = vmax.f32 %v1011, 0.0
    %v1100 = vmax.f32 %v1092, 0.0
    %v1101 = vpack.c.bf16 %v1098, %v1095
    %v1102 = vpack.c.bf16 %v1099, %v1096
    %v1103 = vpack.c.bf16 %v1100, %v1097
    %v1104 = vld [vmem:[#allocation10] sm:$0xf]
    %v1105 = vld [vmem:[#allocation10 + $0x4] sm:$0xf]
    %v1106 = vld [vmem:[#allocation10 + $0x8] sm:$0xf]
    %v1107 = vld [vmem:[#allocation10 + $0xc] sm:$0xf]
    %v1108 = vld [vmem:[#allocation10 + $0x10] sm:$0xf]
    %v1109 = vld [vmem:[#allocation10 + $0x14] sm:$0xf]
    %v1110 = vld [vmem:[#allocation10 + $0x18] sm:$0xf]
    %v1111 = vld [vmem:[#allocation10 + $0x1c] sm:$0xf]
    %v1112 = vld [vmem:[#allocation10 + $0x20] sm:$0xf]
    %v1113 = vld [vmem:[#allocation10 + $0x24] sm:$0xf]
    %v1114 = vld [vmem:[#allocation10 + $0x28] sm:$0xf]
    %v1115 = vld [vmem:[#allocation10 + $0x2c] sm:$0xf]
    %v1116 = vld [vmem:[#allocation10 + $0x30] sm:$0xf]
    %v1117 = vld [vmem:[#allocation10 + $0x34] sm:$0xf]
    %v1118 = vld [vmem:[#allocation10 + $0x38] sm:$0xf]
    %v1119 = vld [vmem:[#allocation10 + $0x3c] sm:$0xf]
    %v1120 = vld [vmem:[#allocation10 + $0x40] sm:$0xf]
    %v1121 = vld [vmem:[#allocation10 + $0x44] sm:$0xf]
    %v1122 = vld [vmem:[#allocation10 + $0x48] sm:$0xf]
    %v1123 = vld [vmem:[#allocation10 + $0x4c] sm:$0xf]
    %v1124 = vld [vmem:[#allocation10 + $0x50] sm:$0xf]
    %v1125 = vld [vmem:[#allocation10 + $0x54] sm:$0xf]
    %v1126 = vld [vmem:[#allocation10 + $0x58] sm:$0xf]
    %v1127 = vld [vmem:[#allocation10 + $0x5c] sm:$0xf]
    %v1128 = vld [vmem:[#allocation10 + $0x60] sm:$0xf]
    %v1129 = vld [vmem:[#allocation10 + $0x64] sm:$0xf]
    %v1130 = vld [vmem:[#allocation10 + $0x68] sm:$0xf]
    %v1131 = vld [vmem:[#allocation10 + $0x6c] sm:$0xf]
    %v1132 = vld [vmem:[#allocation10 + $0x70] sm:$0xf]
    %v1133 = vld [vmem:[#allocation10 + $0x74] sm:$0xf]
    %v1134 = vld [vmem:[#allocation10 + $0x78] sm:$0xf]
    %v1135 = vld [vmem:[#allocation10 + $0x7c] sm:$0xf]
    %v1136 = vld [vmem:[#allocation10 + $0x80] sm:$0xf]
    %v1137 = vld [vmem:[#allocation10 + $0x84] sm:$0xf]
    %v1138 = vld [vmem:[#allocation10 + $0x88] sm:$0xf]
    %v1139 = vld [vmem:[#allocation10 + $0x8c] sm:$0xf]
    %v1140 = vld [vmem:[#allocation10 + $0x90] sm:$0xf]
    %v1141 = vld [vmem:[#allocation10 + $0x94] sm:$0xf]
    %v1142 = vld [vmem:[#allocation10 + $0x98] sm:$0xf]
    %v1143 = vld [vmem:[#allocation10 + $0x9c] sm:$0xf]
    %v1144 = vld [vmem:[#allocation10 + $0xa0] sm:$0xf]
    %v1145 = vld [vmem:[#allocation10 + $0xa4] sm:$0xf]
    %v1146 = vld [vmem:[#allocation10 + $0xa8] sm:$0xf]
    %v1147 = vld [vmem:[#allocation10 + $0xac] sm:$0xf]
    %v1148 = vld [vmem:[#allocation10 + $0xb0] sm:$0xf]
    %v1149 = vld [vmem:[#allocation10 + $0xb4] sm:$0xf]
    %v1150 = vld [vmem:[#allocation10 + $0xb8] sm:$0xf]
    %v1151 = vld [vmem:[#allocation10 + $0xbc] sm:$0xf]
    %v1152 = vld [vmem:[%s6] sm:$0x1]
    %v1154 = vlaneseq
    %v1155 = vshrl.u32 %v1154, 7
    %v1156 = vsub.s32 0, %v1155
    %v1157 = vrot.slane %v1152, %v1156
    %v1207 = vunpack.c.l.b16 %v1104
    %v1208 = vunpack.c.l.b16 %v1105
    %v1209 = vunpack.c.l.b16 %v1106
    %v1210 = vunpack.c.l.b16 %v1107
    %v1211 = vunpack.c.l.b16 %v1108
    %v1212 = vunpack.c.l.b16 %v1109
    %v1213 = vunpack.c.l.b16 %v1110
    %v1214 = vunpack.c.l.b16 %v1111
    %v1215 = vunpack.c.l.b16 %v1112
    %v1216 = vunpack.c.l.b16 %v1113
    %v1217 = vunpack.c.l.b16 %v1114
    %v1218 = vunpack.c.l.b16 %v1115
    %v1219 = vunpack.c.l.b16 %v1116
    %v1220 = vunpack.c.l.b16 %v1117
    %v1221 = vunpack.c.l.b16 %v1118
    %v1222 = vunpack.c.l.b16 %v1119
    %v1223 = vunpack.c.l.b16 %v1120
    %v1224 = vunpack.c.l.b16 %v1121
    %v1225 = vunpack.c.l.b16 %v1122
    %v1226 = vunpack.c.l.b16 %v1123
    %v1227 = vunpack.c.l.b16 %v1124
    %v1228 = vunpack.c.l.b16 %v1125
    %v1229 = vunpack.c.l.b16 %v1126
    %v1230 = vunpack.c.l.b16 %v1127
    %v1231 = vunpack.c.l.b16 %v1128
    %v1232 = vunpack.c.l.b16 %v1129
    %v1233 = vunpack.c.l.b16 %v1130
    %v1234 = vunpack.c.l.b16 %v1131
    %v1235 = vunpack.c.l.b16 %v1132
    %v1236 = vunpack.c.l.b16 %v1133
    %v1237 = vunpack.c.l.b16 %v1134
    %v1238 = vunpack.c.l.b16 %v1135
    %v1239 = vunpack.c.l.b16 %v1136
    %v1240 = vunpack.c.l.b16 %v1137
    %v1241 = vunpack.c.l.b16 %v1138
    %v1242 = vunpack.c.l.b16 %v1139
    %v1243 = vunpack.c.l.b16 %v1140
    %v1244 = vunpack.c.l.b16 %v1141
    %v1245 = vunpack.c.l.b16 %v1142
    %v1246 = vunpack.c.l.b16 %v1143
    %v1247 = vunpack.c.l.b16 %v1144
    %v1248 = vunpack.c.l.b16 %v1145
    %v1249 = vunpack.c.l.b16 %v1146
    %v1250 = vunpack.c.l.b16 %v1147
    %v1251 = vunpack.c.l.b16 %v1148
    %v1252 = vunpack.c.l.b16 %v1149
    %v1253 = vunpack.c.l.b16 %v1150
    %v1254 = vunpack.c.l.b16 %v1151
    %v1255 = vpack.c.b16 %v1208, %v1207
    %v1256 = vpack.c.b16 %v1210, %v1209
    %v1257 = vpack.c.b16 %v1212, %v1211
    %v1258 = vpack.c.b16 %v1214, %v1213
    %v1259 = vpack.c.b16 %v1216, %v1215
    %v1260 = vpack.c.b16 %v1218, %v1217
    %v1261 = vpack.c.b16 %v1220, %v1219
    %v1262 = vpack.c.b16 %v1222, %v1221
    %v1263 = vpack.c.b16 %v1224, %v1223
    %v1264 = vpack.c.b16 %v1226, %v1225
    %v1265 = vpack.c.b16 %v1228, %v1227
    %v1266 = vpack.c.b16 %v1230, %v1229
    %v1267 = vpack.c.b16 %v1232, %v1231
    %v1268 = vpack.c.b16 %v1234, %v1233
    %v1269 = vpack.c.b16 %v1236, %v1235
    %v1270 = vpack.c.b16 %v1238, %v1237
    %v1271 = vpack.c.b16 %v1240, %v1239
    %v1272 = vpack.c.b16 %v1242, %v1241
    %v1273 = vpack.c.b16 %v1244, %v1243
    %v1274 = vpack.c.b16 %v1246, %v1245
    %v1275 = vpack.c.b16 %v1248, %v1247
    %v1276 = vpack.c.b16 %v1250, %v1249
    %v1277 = vpack.c.b16 %v1252, %v1251
    %v1278 = vpack.c.b16 %v1254, %v1253
    %1303 = vmatprep.subr.bf16.mxu0 0
    %1304 = vmatpush1.bf16.msra.mxu0 %v1262
    %1305 = vmatprep.subr.bf16.mxu0 0
    %1306 = vmatpush1.bf16.msra.mxu0 %v1261
    %1307 = vmatprep.subr.bf16.mxu0 0
    %1308 = vmatpush1.bf16.msra.mxu0 %v1260
    %1309 = vmatprep.subr.bf16.mxu0 0
    %1310 = vmatpush1.bf16.msra.mxu0 %v1259
    %1311 = vmatprep.subr.bf16.mxu0 0
    %1312 = vmatpush1.bf16.msra.mxu0 %v1258
    %1313 = vmatprep.subr.bf16.mxu0 0
    %1314 = vmatpush1.bf16.msra.mxu0 %v1257
    %1315 = vmatprep.subr.bf16.mxu0 0
    %1316 = vmatpush1.bf16.msra.mxu0 %v1256
    %1317 = vmatprep.subr.bf16.mxu0 0
    %1318 = vmatpush1.bf16.msra.mxu0 %v1255
    %1319 = vmatprep.subr.bf16.mxu0 0
    %1320 = vmatpush2.bf16.msra.mxu0 %v1270
    %1321 = vmatprep.subr.bf16.mxu0 0
    %1322 = vmatpush2.bf16.msra.mxu0 %v1269
    %1323 = vmatprep.subr.bf16.mxu0 0
    %1324 = vmatpush2.bf16.msra.mxu0 %v1268
    %1325 = vmatprep.subr.bf16.mxu0 0
    %1326 = vmatpush2.bf16.msra.mxu0 %v1267
    %1327 = vmatprep.subr.bf16.mxu0 0
    %1328 = vmatpush2.bf16.msra.mxu0 %v1266
    %1329 = vmatprep.subr.bf16.mxu0 0
    %1330 = vmatpush2.bf16.msra.mxu0 %v1265
    %1331 = vmatprep.subr.bf16.mxu0 0
    %1332 = vmatpush2.bf16.msra.mxu0 %v1264
    %1333 = vmatprep.subr.bf16.mxu0 0
    %1334 = vmatpush2.bf16.msra.mxu0 %v1263
    %1335 = vmatprep.mubr.bf16.mxu0 %v1102
    %1336 = vmatmul.mubr.bf16.gmra.mxu0 %v1101
    %v1337 = vpop.f32.mrf.mxu0
    %v1338 = vadd.f32 %v1157, %v1337
    %v1339 = vpop.f32.mrf.mxu0
    %v1340 = vpop.f32.mrf.mxu0
    %v1341 = vadd.f32 %v1157, %v1340
    %v1342 = vpop.f32.mrf.mxu0
    %1343 = vdwg.mxu0
    %1344 = vmatprep.subr.bf16.mxu0 0
    %1345 = vmatpush1.bf16.msra.mxu0 %v1278
    %1346 = vmatprep.subr.bf16.mxu0 0
    %1347 = vmatpush1.bf16.msra.mxu0 %v1277
    %1348 = vmatprep.subr.bf16.mxu0 0
    %1349 = vmatpush1.bf16.msra.mxu0 %v1276
    %1350 = vmatprep.subr.bf16.mxu0 0
    %1351 = vmatpush1.bf16.msra.mxu0 %v1275
    %1352 = vmatprep.subr.bf16.mxu0 0
    %1353 = vmatpush1.bf16.msra.mxu0 %v1274
    %1354 = vmatprep.subr.bf16.mxu0 0
    %1355 = vmatpush1.bf16.msra.mxu0 %v1273
    %1356 = vmatprep.subr.bf16.mxu0 0
    %1357 = vmatpush1.bf16.msra.mxu0 %v1272
    %1358 = vmatprep.subr.bf16.mxu0 0
    %1359 = vmatpush1.bf16.msra.mxu0 %v1271
    %1360 = vmatprep.subr.bf16.mxu0 0
    %1361 = vmatpush2.bf16.msra.mxu0 0
    %1362 = vmatprep.subr.bf16.mxu0 0
    %1363 = vmatpush2.bf16.msra.mxu0 0
    %1364 = vmatprep.subr.bf16.mxu0 0
    %1365 = vmatpush2.bf16.msra.mxu0 0
    %1366 = vmatprep.subr.bf16.mxu0 0
    %1367 = vmatpush2.bf16.msra.mxu0 0
    %1368 = vmatprep.subr.bf16.mxu0 0
    %1369 = vmatpush2.bf16.msra.mxu0 0
    %1370 = vmatprep.subr.bf16.mxu0 0
    %1371 = vmatpush2.bf16.msra.mxu0 0
    %1372 = vmatprep.subr.bf16.mxu0 0
    %1373 = vmatpush2.bf16.msra.mxu0 0
    %1374 = vmatprep.subr.bf16.mxu0 0
    %1375 = vmatpush2.bf16.msra.mxu0 0
    %1376 = vmatprep.mubr.bf16.mxu0 0
    %1377 = vmatmul.mubr.bf16.gmra.mxu0 %v1103
    %v1378 = vpop.f32.mrf.mxu0
    %v1379 = vadd.f32 %v1338, %v1378
    %v1380 = vpop.f32.mrf.mxu0
    %v1381 = vpop.f32.mrf.mxu0
    %v1382 = vadd.f32 %v1341, %v1381
    %v1383 = vpop.f32.mrf.mxu0
    %1384 = vdwg.mxu0
    %v1385 = vtanh.pop %v1379
    %v1386 = vtanh.pop %v1382
    %v1387 = vmul.f32 %v1385, 2.0
    %v1388 = vmul.f32 %v1386, 2.0
    %v1389 = vpack.c.bf16 %v1388, %v1387
    %v1391 = vunpack.c.l.b16 %v1389
    %v1392 = vunpack.c.h.b16 %v1389
    %v1393 = vpack.c.b16 %v1391, %v1391
    %v1394 = vpack.c.b16 %v1392, %v1392
    %1397 = vst [vmem:[#allocation11] sm:$0xf] %v1393
    %1398 = vst [vmem:[#allocation11 + $0x4] sm:$0xf] %v1394
    // Predicated region
    $region50: #{tpu_custom_call.1} parent=1 // pred_check
      _
    $region51: #{tpu_custom_call.1} parent=1 // pred_check_branch
      %1400 = sbr.rel (0) target = $region53
    $region52: #{tpu_custom_call.1} parent=1 // pred_region
      %s1402 = ssub.s32 128, 128
      %1403 = vsyncadd [#allocation4], %s1402
      %s1404 = sshll.u32 [#allocation11], 4
      %s1405 = int_to_ptr.vmem [resolvable:$true] %s1404
      %1410 = dma.vmem_to_hbm [thread:$0]  %s1405, 128, %s7, [#allocation4], 64, 64, 4
    $region53: #{tpu_custom_call.1} parent=1 // pred_fallthru
      _
    // Predicated region
    $region54: #{tpu_custom_call.1} parent=1 // pred_check
      _
    $region55: #{tpu_custom_call.1} parent=1 // pred_check_branch
      %1412 = sbr.rel (0) target = $region57
    $region56: #{tpu_custom_call.1} parent=1 // pred_region
      %1413 = dma.done [#allocation4], 128
    $region57: #{tpu_custom_call.1} parent=1 // pred_fallthru
      _
    %1414 = vsyncpa [#allocation3], 1
    %1415 = vsyncpa [#allocation6], 1
    %1416 = vsyncpa [#allocation9], 1
    %1417 = vsyncpa [#allocation4], 1

</llo_original>
